<compile_context>
chip_gen: v7x
topology: tpu7x:2x2x1
jax: 0.10.0
libtpu: 0.0.40
codegen_flags: <defaults>
</compile_context>

<pallas_src>
import jax
import jax.numpy as jnp
from jax.experimental import pallas as pl
from jax.experimental.pallas import tpu as pltpu


# ---------------------------------------------------------------------------
# Helpers
# ---------------------------------------------------------------------------

def _round_up(x, m):
    return ((x + m - 1) // m) * m


def _vmem_capacity_bytes():
    """Physical VMEM capacity of the local TPU (conservative fallback)."""
    try:
        info = pltpu.get_tpu_info()
        cap = getattr(info, "vmem_capacity_bytes", None)
        if cap:
            return int(cap)
    except Exception:
        pass
    return 64 << 20  # v7x per-TensorCore size: safe lower bound everywhere


# ---------------------------------------------------------------------------
# Kernels
# ---------------------------------------------------------------------------

def _td_linear_kernel_resident(x_ref, w_ref, b_ref, o_ref):
    """W fully resident in VMEM: 1-D grid over the folded batch (M)."""
    acc = jnp.dot(x_ref[...], w_ref[...], preferred_element_type=jnp.float32)
    o_ref[...] = (acc + b_ref[...]).astype(o_ref.dtype)


def _td_linear_kernel_tiled(x_ref, w_ref, b_ref, o_ref, acc_ref):
    """General path: (M, N, K) grid with f32 VMEM accumulator, K innermost."""
    @pl.when(pl.program_id(2) == 0)
    def _init():
        acc_ref[...] = jnp.zeros_like(acc_ref)

    acc_ref[...] += jnp.dot(
        x_ref[...], w_ref[...], preferred_element_type=jnp.float32
    )

    @pl.when(pl.program_id(2) == pl.num_programs(2) - 1)
    def _finalize():
        # bias block is f32 [1, tn]; broadcast over tm sublanes on the f32 acc.
        o_ref[...] = (acc_ref[...] + b_ref[...]).astype(o_ref.dtype)


# ---------------------------------------------------------------------------
# Wrapper: TimeDistributed(Linear) forward
# ---------------------------------------------------------------------------

def time_distributed_linear(x, w, b, *, compute_dtype=None, out_dtype=None):
    """x: [B, T, ..., F_in]; w: [F_in, F_out]; b: [F_out].

    Equivalent to x.contiguous().view(B*T*..., F_in) @ w + b, reshaped back to
    [B, T, ..., F_out]  (i.e. TimeDistributed(nn.Linear(F_in, F_out))).

    compute_dtype: MXU feed dtype (default: x.dtype; use jnp.bfloat16 on
    v5e/v6e/v7x for full MXU throughput).  Accumulation + bias add are f32.
    """
    *lead, f_in = x.shape
    k_w, f_out = w.shape
    assert k_w == f_in, "weight in-features must match x's last dim"

    if compute_dtype is None:
        compute_dtype = x.dtype
    if out_dtype is None:
        out_dtype = x.dtype

    csize = jnp.dtype(compute_dtype).itemsize
    osize = jnp.dtype(out_dtype).itemsize

    # --- the TimeDistributed fold: contiguous().view(B*T*..., F_in) ---------
    m = 1
    for d in lead:
        m *= d
    x2 = x.reshape(m, f_in).astype(compute_dtype)
    w2 = w.astype(compute_dtype)
    b2 = b.astype(jnp.float32).reshape(1, f_out)  # bias stays f32 (no bf16 round-trip)

    # --- VMEM budget (generation aware) -------------------------------------
    cap = _vmem_capacity_bytes()                 # 64 MiB (v7x) / 128 MiB (v5e, v6e)
    budget = min(cap // 2, 48 << 20)             # target resident working set
    vmem_limit = int(min((cap * 3) // 4, 2 * budget))

    # --- lane-dense output: pad F_out up to a multiple of 128 ---------------
    n_pad = _round_up(f_out, 128)
    if n_pad != f_out:
        w2 = jnp.pad(w2, ((0, 0), (0, n_pad - f_out)))
        b2 = jnp.pad(b2, ((0, 0), (0, n_pad - f_out)))

    # Bytes for a fully VMEM-resident weight + bias (double-buffered by Pallas).
    w_resident_bytes = 2 * f_in * n_pad * csize + 2 * n_pad * 4

    if w_resident_bytes <= budget // 2:
        # ------------------ fast path: W resident, grid = (M tiles,) --------
        per_row = 2 * f_in * csize + 2 * n_pad * osize   # x + out, double-buffered
        tm = 8
        for cand in (2048, 1024, 512, 256, 128, 64, 32, 16, 8):
            if w_resident_bytes + cand * per_row <= budget:
                tm = cand
                break
        tm = min(tm, _round_up(m, 8))            # don't over-pad tiny folded batches
        m_pad = _round_up(m, tm)
        if m_pad != m:
            x2 = jnp.pad(x2, ((0, m_pad - m), (0, 0)))
        grid = (m_pad // tm,)

        # TODO(synk): if profiling shows exposed DMA on the streamed x input,
        # add pipeline_mode=pl.Buffered(3) to its BlockSpec only.
        out2 = pl.pallas_call(
            _td_linear_kernel_resident,
            out_shape=jax.ShapeDtypeStruct((m_pad, n_pad), out_dtype),
            grid_spec=pltpu.PrefetchScalarGridSpec(
                num_scalar_prefetch=0,
                grid=grid,
                in_specs=[
                    pl.BlockSpec((tm, f_in), lambda i: (i, 0)),       # x tile (streamed)
                    pl.BlockSpec((f_in, n_pad), lambda i: (0, 0)),    # W (resident)
                    pl.BlockSpec((1, n_pad), lambda i: (0, 0)),       # bias (resident)
                ],
                out_specs=pl.BlockSpec((tm, n_pad), lambda i: (i, 0)),
            ),
            compiler_params=pltpu.CompilerParams(
                dimension_semantics=("parallel",),
                vmem_limit_bytes=vmem_limit,
            ),
        )(x2, w2, b2)
    else:
        # ------------------ general path: tiled (M, N, K) grid --------------
        tn = 128
        for cand in (512, 256, 128):
            if cand <= n_pad and n_pad % cand == 0:
                tn = cand
                break
        tk = 128
        k_pad128 = _round_up(f_in, 128)
        for cand in (2048, 1024, 512, 256, 128):
            if cand <= k_pad128:
                tk = cand
                break
        k_pad = _round_up(f_in, tk)

        fixed = 2 * tk * tn * csize + 2 * tn * 4           # W tile + bias tile
        tm = 8
        for cand in (1024, 512, 256, 128, 64, 32, 16, 8):
            per = (2 * cand * tk * csize          # x tile (double-buffered)
                   + 2 * cand * tn * osize        # out tile (double-buffered)
                   + cand * tn * 4)               # f32 accumulator scratch
            if fixed + per <= budget:
                tm = cand
                break
        tm = min(tm, _round_up(m, 8))
        m_pad = _round_up(m, tm)

        if m_pad != m or k_pad != f_in:
            x2 = jnp.pad(x2, ((0, m_pad - m), (0, k_pad - f_in)))
        if k_pad != f_in:
            w2 = jnp.pad(w2, ((0, k_pad - f_in), (0, 0)))

        grid = (m_pad // tm, n_pad // tn, k_pad // tk)
        out2 = pl.pallas_call(
            _td_linear_kernel_tiled,
            out_shape=jax.ShapeDtypeStruct((m_pad, n_pad), out_dtype),
            grid_spec=pltpu.PrefetchScalarGridSpec(
                num_scalar_prefetch=0,
                grid=grid,
                in_specs=[
                    pl.BlockSpec((tm, tk), lambda i, j, k: (i, k)),   # x tile
                    pl.BlockSpec((tk, tn), lambda i, j, k: (k, j)),   # W tile
                    pl.BlockSpec((1, tn), lambda i, j, k: (0, j)),    # bias tile
                ],
                out_specs=pl.BlockSpec((tm, tn), lambda i, j, k: (i, j)),
                scratch_shapes=[pltpu.VMEM((tm, tn), jnp.float32)],
            ),
            compiler_params=pltpu.CompilerParams(
                dimension_semantics=("parallel", "parallel", "arbitrary"),
                vmem_limit_bytes=vmem_limit,
            ),
        )(x2, w2, b2)

    # --- slice padding off, then the TimeDistributed unfold -----------------
    out2 = out2[:m, :f_out]
    return out2.reshape(*lead, f_out)


# ---------------------------------------------------------------------------
# Demo / check
# ---------------------------------------------------------------------------

def _reference(x, w, b):
    lead = x.shape[:-1]
    f_in = x.shape[-1]
    m = 1
    for d in lead:
        m *= d
    return (x.reshape(m, f_in) @ w + b).reshape(*lead, w.shape[1])


if __name__ == "__main__":
    key = jax.random.PRNGKey(0)

    # Case 1: canonical small TimeDistributed(Linear) shapes.
    batch, time_steps, f_in, f_out = 2, 8, 32, 32
    k1, k2, k3, key = jax.random.split(key, 4)
    x = jax.random.normal(k1, (batch, time_steps, f_in), dtype=jnp.float32)
    w = jax.random.normal(k2, (f_in, f_out), dtype=jnp.float32) * 0.1
    b = jax.random.normal(k3, (f_out,), dtype=jnp.float32) * 0.1

    out = jax.block_until_ready(time_distributed_linear(x, w, b))
    ref = _reference(x, w, b)
    assert out.shape == (batch, time_steps, f_out)
    assert jnp.allclose(out, ref, atol=1e-4, rtol=1e-4), "mismatch vs reference (case 1)"

    # Case 2: non-divisible B*T and F_out (exercises the M / lane padding paths).
    batch2, time2, f_in2, f_out2 = 3, 5, 48, 72
    k4, k5, k6, key = jax.random.split(key, 4)
    x2 = jax.random.normal(k4, (batch2, time2, f_in2), dtype=jnp.float32)
    w2 = jax.random.normal(k5, (f_in2, f_out2), dtype=jnp.float32) * 0.1
    b2 = jax.random.normal(k6, (f_out2,), dtype=jnp.float32) * 0.1

    out2 = jax.block_until_ready(time_distributed_linear(x2, w2, b2))
    ref2 = _reference(x2, w2, b2)
    assert out2.shape == (batch2, time2, f_out2)
    assert jnp.allclose(out2, ref2, atol=1e-4, rtol=1e-4), "mismatch vs reference (case 2)"

    print("KERNEL_OK")
</pallas_src>

<mosaic_0001>
module attributes {stable_mosaic.version = 11 : i64} {
  func.func @_td_linear_kernel_resident(%arg0: i32, %arg1: memref<16x32xf32, #tpu.memory_space<vmem>>, %arg2: memref<32x128xf32, #tpu.memory_space<vmem>>, %arg3: memref<1x128xf32, #tpu.memory_space<vmem>>, %arg4: memref<16x128xf32, #tpu.memory_space<vmem>>) attributes {dimension_semantics = [#tpu.dimension_semantics<parallel>], iteration_bounds = array<i64: 1>, scalar_prefetch = 0 : i64, scratch_operands = 0 : i64, tpu.core_type = #tpu.core_type<tc>, window_params = [{transform_indices = @transform_0, window_bounds = array<i64: 16, 32>}, {pipeline_mode = #tpu.pipeline_mode<synchronous>, transform_indices = @transform_1, window_bounds = array<i64: 32, 128>}, {pipeline_mode = #tpu.pipeline_mode<synchronous>, transform_indices = @transform_2, window_bounds = array<i64: 1, 128>}, {transform_indices = @transform_3, window_bounds = array<i64: 16, 128>}]} {
    %c0 = arith.constant 0 : index
    %c0_0 = arith.constant 0 : index
    %0 = vector.load %arg1[%c0, %c0_0] : memref<16x32xf32, #tpu.memory_space<vmem>>, vector<16x32xf32>
    %c0_1 = arith.constant 0 : index
    %c0_2 = arith.constant 0 : index
    %1 = vector.load %arg2[%c0_1, %c0_2] : memref<32x128xf32, #tpu.memory_space<vmem>>, vector<32x128xf32>
    %cst = arith.constant dense<0.000000e+00> : vector<16x128xf32>
    %2 = tpu.matmul %0, %1, %cst {dimension_numbers = #tpu.dot_dimension_numbers<[1], [0], [0], [1], [0, 0, 1, 1], [], []>} : vector<16x32xf32>, vector<32x128xf32>, vector<16x128xf32> -> vector<16x128xf32>
    %c0_3 = arith.constant 0 : index
    %c0_4 = arith.constant 0 : index
    %3 = vector.load %arg3[%c0_3, %c0_4] : memref<1x128xf32, #tpu.memory_space<vmem>>, vector<1x128xf32>
    %4 = vector.broadcast %3 : vector<1x128xf32> to vector<16x128xf32>
    %5 = arith.addf %2, %4 : vector<16x128xf32>
    %c0_5 = arith.constant 0 : index
    %c0_6 = arith.constant 0 : index
    %6 = vector.load %arg4[%c0_5, %c0_6] : memref<16x128xf32, #tpu.memory_space<vmem>>, vector<16x128xf32>
    tpu.vector_store %arg4[%c0_5, %c0_6], %5 {strides = array<i32>} : memref<16x128xf32, #tpu.memory_space<vmem>>, vector<16x128xf32>,
    return
  }
  func.func @transform_0(%arg0: i32) -> (i32, i32) {
    %c0_i32 = arith.constant 0 : i32
    %c0_i32_0 = arith.constant 0 : i32
    return %arg0, %c0_i32 : i32, i32
  }
  func.func @transform_1(%arg0: i32) -> (i32, i32) {
    %c0_i32 = arith.constant 0 : i32
    %c0_i32_0 = arith.constant 0 : i32
    %c0_i32_1 = arith.constant 0 : i32
    return %c0_i32, %c0_i32_0 : i32, i32
  }
  func.func @transform_2(%arg0: i32) -> (i32, i32) {
    %c0_i32 = arith.constant 0 : i32
    %c0_i32_0 = arith.constant 0 : i32
    %c0_i32_1 = arith.constant 0 : i32
    return %c0_i32, %c0_i32_0 : i32, i32
  }
  func.func @transform_3(%arg0: i32) -> (i32, i32) {
    %c0_i32 = arith.constant 0 : i32
    %c0_i32_0 = arith.constant 0 : i32
    return %arg0, %c0_i32 : i32, i32
  }
}

</mosaic_0001>

<llo_original>
// kernel: tpu_custom_call.1
$region0: #{tpu_custom_call.1}
  #allocation0 [shape = 'u32[]', space=smem, size = 0x4, offset = 0x4, fixed_abs, tag = 'smem constant byte address 0x4 - core index']
  #allocation1 [shape = 'u32[144,128]{1,0:T(1,128)}', space=vmem, size = 0x12000, scoped, tag = 'internal scratch']
  %s0 = inlined_call_operand.hbm [shape: f32[16,32], index: 0, kind: input, shape index: {}]
  %s1 = inlined_call_operand.hbm [shape: f32[32,128], index: 1, kind: input, shape index: {}]
  %s2 = inlined_call_operand.vmem [shape: f32[1,128], index: 2, kind: input, shape index: {}]
  %s3 = inlined_call_operand.hbm [shape: f32[16,128], index: 3, kind: output, shape index: {}]
  %s4 = sld [smem:[#allocation0]]
  $region30: #{tpu_custom_call.1} parent=0
    _
  %s6 = ssub.s32 1, %s4
  %s7 = scalar_select 0, %s6, %s4
  $region1: #{tpu_custom_call.1} parent=0
    #allocation2 [shape = 'u8[8192]{0}', space=vmem, size = 0x2000, scoped, tag = 'input window, operand 0, single buffered']
    #allocation3 [shape = 's32[1]{0}', space=sflag, size = 0x4, scoped, tag = 'scoped memory for tpu_custom_call.1']
    #allocation4 [shape = 's32[1]{0}', space=sflag, size = 0x4, scoped, tag = 'scoped memory for tpu_custom_call.1']
    #allocation5 [shape = 'u8[16384]{0}', space=vmem, size = 0x4000, scoped, tag = 'input window, operand 1, single buffered']
    #allocation6 [shape = 's32[1]{0}', space=sflag, size = 0x4, scoped, tag = 'scoped memory for tpu_custom_call.1']
    #allocation7 [shape = 'u8[8192]{0}', space=vmem, size = 0x2000, scoped, tag = 'output window, operand 0, single buffered']
    %8 = vsyncpa [#allocation3], 0
    %9 = vsyncpa [#allocation6], 0
    %10 = vsyncpa [#allocation4], 0
    // Predicated region
    $region2: #{tpu_custom_call.1} parent=1 // pred_check
      _
    $region3: #{tpu_custom_call.1} parent=1 // pred_check_branch
      %12 = sbr.rel (0) target = $region5
    $region4: #{tpu_custom_call.1} parent=1 // pred_region
      %s14 = ssub.s32 256, 256
      %15 = vsyncadd [#allocation3], %s14
      %s16 = sshll.u32 [#allocation2], 4
      %s17 = int_to_ptr.vmem [resolvable:$true] %s16
      %22 = dma.hbm_to_vmem [thread:$0]  %s0, 256, %s17, [#allocation3], 128, 128, 8
    $region5: #{tpu_custom_call.1} parent=1 // pred_fallthru
      _
    // Predicated region
    $region6: #{tpu_custom_call.1} parent=1 // pred_check
      _
    $region7: #{tpu_custom_call.1} parent=1 // pred_check_branch
      %24 = sbr.rel (0) target = $region9
    $region8: #{tpu_custom_call.1} parent=1 // pred_region
      %s26 = ssub.s32 512, 512
      %27 = vsyncadd [#allocation6], %s26
      %s28 = sshll.u32 [#allocation5], 4
      %s29 = int_to_ptr.vmem [resolvable:$true] %s28
      %34 = dma.hbm_to_vmem [thread:$0]  %s1, 512, %s29, [#allocation6], 128, 128, 8
    $region9: #{tpu_custom_call.1} parent=1 // pred_fallthru
      _
    // Predicated region
    $region10: #{tpu_custom_call.1} parent=1 // pred_check
      _
    $region11: #{tpu_custom_call.1} parent=1 // pred_check_branch
      %36 = sbr.rel (0) target = $region13
    $region12: #{tpu_custom_call.1} parent=1 // pred_region
      _
    $region13: #{tpu_custom_call.1} parent=1 // pred_fallthru
      _
    // Predicated region
    $region14: #{tpu_custom_call.1} parent=1 // pred_check
      _
    $region15: #{tpu_custom_call.1} parent=1 // pred_check_branch
      %38 = sbr.rel (0) target = $region17
    $region16: #{tpu_custom_call.1} parent=1 // pred_region
      %39 = dma.done [#allocation3], 256
    $region17: #{tpu_custom_call.1} parent=1 // pred_fallthru
      _
    // Predicated region
    $region18: #{tpu_custom_call.1} parent=1 // pred_check
      _
    $region19: #{tpu_custom_call.1} parent=1 // pred_check_branch
      %41 = sbr.rel (0) target = $region21
    $region20: #{tpu_custom_call.1} parent=1 // pred_region
      %42 = dma.done [#allocation6], 512
    $region21: #{tpu_custom_call.1} parent=1 // pred_fallthru
      _
    %v43 = vld [vmem:[#allocation2] sm:$0xff]
    %v44 = vld [vmem:[#allocation2 + $0x8] sm:$0xff]
    %v45 = vld [vmem:[#allocation5] sm:$0xff]
    %v46 = vld [vmem:[#allocation5 + $0x8] sm:$0xff]
    %v47 = vld [vmem:[#allocation5 + $0x10] sm:$0xff]
    %v48 = vld [vmem:[#allocation5 + $0x18] sm:$0xff]
    %v49 = vld [vmem:[%s2] sm:$0x1]
    %v51 = vlaneseq
    %v52 = vshrl.u32 %v51, 7
    %v53 = vsub.s32 0, %v52
    %v54 = vrot.slane %v49, %v53
    %vm56 = vcmask 261120
    %v58 = vsel %vm56, %v43, 0
    %v61 = vsel %vm56, %v44, 0
    %63 = vmatprep.subr.mxu0 0.0
    %64 = vmatpush1.msra.mxu0 %v45
    %65 = vmatprep.subr.mxu0 0.0
    %66 = vmatpush1.msra.mxu0 %v46
    %67 = vmatprep.subr.mxu0 0.0
    %68 = vmatpush1.msra.mxu0 %v47
    %69 = vmatprep.subr.mxu0 0.0
    %70 = vmatpush1.msra.mxu0 %v48
    %71 = vmatprep.subr.mxu0 0.0
    %72 = vmatpush1.msra.mxu0 0.0
    %73 = vmatprep.subr.mxu0 0.0
    %74 = vmatpush1.msra.mxu0 0.0
    %75 = vmatprep.subr.mxu0 0.0
    %76 = vmatpush1.msra.mxu0 0.0
    %77 = vmatprep.subr.mxu0 0.0
    %78 = vmatpush1.msra.mxu0 0.0
    %79 = vmatprep.subr.mxu0 0.0
    %80 = vmatpush1.msra.mxu0 0.0
    %81 = vmatprep.subr.mxu0 0.0
    %82 = vmatpush1.msra.mxu0 0.0
    %83 = vmatprep.subr.mxu0 0.0
    %84 = vmatpush1.msra.mxu0 0.0
    %85 = vmatprep.subr.mxu0 0.0
    %86 = vmatpush1.msra.mxu0 0.0
    %87 = vmatprep.subr.mxu0 0.0
    %88 = vmatpush1.msra.mxu0 0.0
    %89 = vmatprep.subr.mxu0 0.0
    %90 = vmatpush1.msra.mxu0 0.0
    %91 = vmatprep.subr.mxu0 0.0
    %92 = vmatpush1.msra.mxu0 0.0
    %93 = vmatprep.subr.mxu0 0.0
    %94 = vmatpush1.msra.mxu0 0.0
    %95 = vmatprep.subr.mxu0 0.0
    %96 = vmatpush1.msra.mxu0 0.0
    %97 = vmatprep.subr.mxu0 0.0
    %98 = vmatpush1.msra.mxu0 0.0
    %99 = vmatprep.subr.mxu0 0.0
    %100 = vmatpush1.msra.mxu0 0.0
    %101 = vmatprep.subr.mxu0 0.0
    %102 = vmatpush1.msra.mxu0 0.0
    %103 = vmatprep.subr.mxu0 0.0
    %104 = vmatpush1.msra.mxu0 0.0
    %105 = vmatprep.subr.mxu0 0.0
    %106 = vmatpush1.msra.mxu0 0.0
    %107 = vmatprep.subr.mxu0 0.0
    %108 = vmatpush1.msra.mxu0 0.0
    %109 = vmatprep.subr.mxu0 0.0
    %110 = vmatpush1.msra.mxu0 0.0
    %111 = vmatprep.subr.mxu0 0.0
    %112 = vmatpush1.msra.mxu0 0.0
    %113 = vmatprep.subr.mxu0 0.0
    %114 = vmatpush1.msra.mxu0 0.0
    %115 = vmatprep.subr.mxu0 0.0
    %116 = vmatpush1.msra.mxu0 0.0
    %117 = vmatprep.subr.mxu0 0.0
    %118 = vmatpush1.msra.mxu0 0.0
    %119 = vmatprep.subr.mxu0 0.0
    %120 = vmatpush1.msra.mxu0 0.0
    %121 = vmatprep.subr.mxu0 0.0
    %122 = vmatpush1.msra.mxu0 0.0
    %123 = vmatprep.subr.mxu0 0.0
    %124 = vmatpush1.msra.mxu0 0.0
    %125 = vmatprep.subr.mxu0 0.0
    %126 = vmatpush1.msra.mxu0 0.0
    %127 = vmatprep.mubr.f32.mxu0 0.0
    %128 = vmatmul.mubr.f32.gmra.mrb[0].mxu0 %v58
    %v129 = vpop.f32.mrb[0].mxu0
    %v130 = vadd.f32 %v54, %v129
    %v131 = vpop.f32.mrb[0].mxu0
    %132 = vmatprep.mubr.f32.mxu0 0.0
    %133 = vmatmul.mubr.f32.gmra.mrb[0].mxu0 %v61
    %v134 = vpop.f32.mrb[0].mxu0
    %v135 = vadd.f32 %v54, %v134
    %v136 = vpop.f32.mrb[0].mxu0
    %137 = vdwg.mxu0
    %138 = vst [vmem:[#allocation7] sm:$0xff] %v130
    %139 = vst [vmem:[#allocation7 + $0x8] sm:$0xff] %v135
    // Predicated region
    $region22: #{tpu_custom_call.1} parent=1 // pred_check
      _
    $region23: #{tpu_custom_call.1} parent=1 // pred_check_branch
      %141 = sbr.rel (0) target = $region25
    $region24: #{tpu_custom_call.1} parent=1 // pred_region
      %s143 = ssub.s32 256, 256
      %144 = vsyncadd [#allocation4], %s143
      %s145 = sshll.u32 [#allocation7], 4
      %s146 = int_to_ptr.vmem [resolvable:$true] %s145
      %151 = dma.vmem_to_hbm [thread:$0]  %s146, 256, %s3, [#allocation4], 128, 128, 8
    $region25: #{tpu_custom_call.1} parent=1 // pred_fallthru
      _
    // Predicated region
    $region26: #{tpu_custom_call.1} parent=1 // pred_check
      _
    $region27: #{tpu_custom_call.1} parent=1 // pred_check_branch
      %153 = sbr.rel (0) target = $region29
    $region28: #{tpu_custom_call.1} parent=1 // pred_region
      %154 = dma.done [#allocation4], 256
    $region29: #{tpu_custom_call.1} parent=1 // pred_fallthru
      _
    %155 = vsyncpa [#allocation3], 1
    %156 = vsyncpa [#allocation6], 1
    %157 = vsyncpa [#allocation4], 1

</llo_original>
